<compile_context>
chip_gen: v5e
topology: v5e:2x2
jax: 0.10.0
libtpu: 0.0.40
codegen_flags: <defaults>
</compile_context>

<pallas_src>
import math
import functools

import jax
import jax.numpy as jnp
from jax.experimental import pallas as pl
from jax.experimental.pallas import tpu as pltpu


def _round_up(a, b):
    return (a + b - 1) // b * b


def _time_encoding_kernel(k, pred_ref, x_ref, t_ref, expand_ref, phase_ref, o_ref):
    # pred_ref: SMEM (1, 1) f32 holding pred_time * 60
    # x_ref/o_ref: (TM, Dp)   t_ref: (TM, k)   expand_ref: (k, Dp)   phase_ref: (1, Dp)
    tprime = pred_ref[0, 0] - t_ref[...]                       # (TM, k) f32
    if k == 1:
        # Single group: plain broadcast multiply, no contraction needed.
        arg = tprime * expand_ref[...]                          # (TM,1)*(1,Dp) -> (TM,Dp)
    else:
        # arg[i, g*D + j] = tprime[i, g] * div_term[j // 2] via a block-diagonal
        # expansion matrix on the (idle) MXU.  HIGHEST precision keeps f32
        # accuracy for |t'| up to hundreds of radians.
        arg = jnp.dot(tprime, expand_ref[...],
                      precision=jax.lax.Precision.HIGHEST,
                      preferred_element_type=jnp.float32)       # (TM, Dp)
    pe = jnp.sin(arg + phase_ref[...])                          # cos folded in via +pi/2 phase
    o_ref[...] = (x_ref[...] + pe).astype(o_ref.dtype)
    # TODO(synk): nn.Dropout is identity in eval mode; training-mode dropout
    # (pltpu.prng_seed / stateful_bernoulli) intentionally not applied here.


def flatten_time_encoding(x, times, div_term, pred_time, *, tm=None):
    """x: (B, S, D), times: (B, S), div_term: (ceil(D/2),) -> (B, S, D)."""
    B, S, D = x.shape
    N = B * S
    itemsize = jnp.dtype(x.dtype).itemsize
    sub = {4: 8, 2: 16, 1: 32}.get(itemsize, 8)   # sublane tile for this dtype

    # Lane packing: pack k rows per lane-row so every block is 128-lane dense
    # (full vld/vst instead of masked partial stores).  Only pack when it costs
    # no padding at all (N % k == 0); otherwise fall back to k = 1.
    k, Dp = 1, D
    if D < 128:
        k_cand = (D * 128 // math.gcd(D, 128)) // D       # lcm(D,128) // D
        if N % k_cand == 0:
            k, Dp = k_cand, k_cand * D
    rows = N // k

    if tm is None:
        # ~2-4 MiB blocks: big enough to amortize the ~0.35us per-grid-step
        # overhead even at v7x's 3.2 TB/s HBM, small enough that double-buffered
        # in + out blocks stay far below v7x's 64 MiB physical VMEM.
        tm = max(sub, min(4096, (4 << 20) // (Dp * itemsize)))
    tm = _round_up(min(tm, _round_up(rows, sub)), sub)

    # Free row-major reshapes (no copies, no padding).
    xp = x.reshape(rows, Dp)
    tp = times.reshape(rows, k).astype(jnp.float32)

    # Per-lane constants (tiny, built in plain JAX).
    col = jnp.arange(Dp)
    j_in = col % D                                           # feature index within group
    grp = col // D                                           # packed group index
    div_full = div_term.astype(jnp.float32)[j_in // 2]       # (Dp,)
    phase = jnp.where(j_in % 2 == 0, 0.0, math.pi / 2.0).astype(jnp.float32).reshape(1, Dp)
    expand = jnp.where(grp[None, :] == jnp.arange(k)[:, None],
                       div_full[None, :], 0.0).astype(jnp.float32)   # (k, Dp) block-diagonal

    # Runtime scalar (SMEM) -> no recompile per pred_time value.
    pred60 = (jnp.asarray(pred_time, jnp.float32) * 60.0).reshape(1, 1)

    cost = pl.CostEstimate(
        flops=int((2 * k + 3) * rows * Dp),
        transcendentals=int(rows * Dp),
        bytes_accessed=int(2 * rows * Dp * itemsize + rows * k * 4),
    )

    grid = (pl.cdiv(rows, tm),)    # ragged last block handled by Pallas masking

    outp = pl.pallas_call(
        functools.partial(_time_encoding_kernel, k),
        out_shape=jax.ShapeDtypeStruct((rows, Dp), x.dtype),
        grid_spec=pltpu.PrefetchScalarGridSpec(
            num_scalar_prefetch=0,
            grid=grid,
            in_specs=[
                pl.BlockSpec(memory_space=pltpu.MemorySpace.SMEM),   # pred_time*60 scalar
                pl.BlockSpec((tm, Dp), lambda i: (i, 0)),            # x rows (lane-packed)
                pl.BlockSpec((tm, k), lambda i: (i, 0)),             # times (compact)
                pl.BlockSpec((k, Dp), lambda i: (0, 0)),             # block-diag div expansion
                pl.BlockSpec((1, Dp), lambda i: (0, 0)),             # phase (0 even / pi/2 odd)
            ],
            out_specs=pl.BlockSpec((tm, Dp), lambda i: (i, 0)),
        ),
        compiler_params=pltpu.CompilerParams(
            # TODO(synk): on v7x verify both TensorCores pick up the row grid;
            # if not, switch this axis to pltpu.CORE_PARALLEL.
            dimension_semantics=("parallel",),
            vmem_limit_bytes=48 * 1024 * 1024,
        ),
        cost_estimate=cost,
    )(pred60, xp, tp, expand, phase)

    return outp.reshape(B, S, D)   # free reshape, no slicing needed


def _reference(x, times, div_term, pred_time):
    # Pure-JAX reference mirroring the PyTorch forward (eval mode).
    t = pred_time * 60.0 - times                      # (B, S)
    arg = t[..., None] * div_term[None, None, :]      # (B, S, ceil(D/2))
    D = x.shape[-1]
    pe = jnp.zeros_like(x)
    pe = pe.at[:, :, 0::2].set(jnp.sin(arg)[:, :, :(D + 1) // 2])
    pe = pe.at[:, :, 1::2].set(jnp.cos(arg)[:, :, :D // 2])
    return x + pe


if __name__ == "__main__":
    # pred_dim = hidden size D, pred_time in hours.
    B, S, D = 2, 8, 32
    pred_time = 6.0
    key = jax.random.PRNGKey(0)
    kx, kt = jax.random.split(key)

    x = jax.random.normal(kx, (B, S, D), dtype=jnp.float32)
    times = jax.random.uniform(kt, (B, S), dtype=jnp.float32,
                               minval=0.0, maxval=pred_time * 60.0)

    # Same deterministic init formula as the module's __init__.
    div_term = jnp.exp(jnp.arange(0, D, 2, dtype=jnp.float32)
                       * (-math.log(10000.0) / D))

    out = flatten_time_encoding(x, times, div_term, pred_time)
    out = jax.block_until_ready(out)

    ref = _reference(x, times, div_term, pred_time)
    assert out.shape == x.shape and out.dtype == x.dtype
    # cos(x) = sin(x + pi/2) and the f32-precision MXU spread each drift by
    # O(|t'| * eps_f32) ~ 1.5e-5 worst case at |t'| ~ 360; 1e-4 covers it.
    assert jnp.allclose(out, ref, atol=1e-4, rtol=1e-4), "mismatch vs reference"
    print("KERNEL_OK")
</pallas_src>

<mosaic_0001>
module attributes {stable_mosaic.version = 11 : i64} {
  func.func @_time_encoding_kernel(%arg0: i32, %arg1: memref<1x1xf32, #tpu.memory_space<smem>>, %arg2: memref<8x128xf32, #tpu.memory_space<vmem>>, %arg3: memref<8x4xf32, #tpu.memory_space<vmem>>, %arg4: memref<4x128xf32, #tpu.memory_space<vmem>>, %arg5: memref<1x128xf32, #tpu.memory_space<vmem>>, %arg6: memref<8x128xf32, #tpu.memory_space<vmem>>) attributes {dimension_semantics = [#tpu.dimension_semantics<parallel>], iteration_bounds = array<i64: 1>, scalar_prefetch = 0 : i64, scratch_operands = 0 : i64, tpu.core_type = #tpu.core_type<tc>, window_params = [{transform_indices = @transform_0, window_bounds = array<i64: 1, 1>}, {transform_indices = @transform_1, window_bounds = array<i64: 8, 128>}, {transform_indices = @transform_2, window_bounds = array<i64: 8, 4>}, {pipeline_mode = #tpu.pipeline_mode<synchronous>, transform_indices = @transform_3, window_bounds = array<i64: 4, 128>}, {pipeline_mode = #tpu.pipeline_mode<synchronous>, transform_indices = @transform_4, window_bounds = array<i64: 1, 128>}, {transform_indices = @transform_5, window_bounds = array<i64: 8, 128>}]} {
    %c0 = arith.constant 0 : index
    %c0_0 = arith.constant 0 : index
    %0 = memref.load %arg1[%c0, %c0_0] : memref<1x1xf32, #tpu.memory_space<smem>>
    %c0_1 = arith.constant 0 : index
    %c0_2 = arith.constant 0 : index
    %1 = vector.load %arg3[%c0_1, %c0_2] : memref<8x4xf32, #tpu.memory_space<vmem>>, vector<8x4xf32>
    %2 = vector.broadcast %0 : f32 to vector<8x4xf32>
    %3 = arith.subf %2, %1 : vector<8x4xf32>
    %c0_3 = arith.constant 0 : index
    %c0_4 = arith.constant 0 : index
    %4 = vector.load %arg4[%c0_3, %c0_4] : memref<4x128xf32, #tpu.memory_space<vmem>>, vector<4x128xf32>
    %cst = arith.constant dense<0.000000e+00> : vector<8x128xf32>
    %5 = tpu.matmul %3, %4, %cst {dimension_numbers = #tpu.dot_dimension_numbers<[1], [0], [0], [1], [0, 0, 1, 1], [], []>, precision = #tpu.contract_precision<fp32>} : vector<8x4xf32>, vector<4x128xf32>, vector<8x128xf32> -> vector<8x128xf32>
    %c0_5 = arith.constant 0 : index
    %c0_6 = arith.constant 0 : index
    %6 = vector.load %arg5[%c0_5, %c0_6] : memref<1x128xf32, #tpu.memory_space<vmem>>, vector<1x128xf32>
    %7 = vector.broadcast %6 : vector<1x128xf32> to vector<8x128xf32>
    %8 = arith.addf %5, %7 : vector<8x128xf32>
    %9 = math.sin %8 : vector<8x128xf32>
    %c0_7 = arith.constant 0 : index
    %c0_8 = arith.constant 0 : index
    %10 = vector.load %arg2[%c0_7, %c0_8] : memref<8x128xf32, #tpu.memory_space<vmem>>, vector<8x128xf32>
    %11 = arith.addf %10, %9 : vector<8x128xf32>
    %c0_9 = arith.constant 0 : index
    %c0_10 = arith.constant 0 : index
    %12 = vector.load %arg6[%c0_9, %c0_10] : memref<8x128xf32, #tpu.memory_space<vmem>>, vector<8x128xf32>
    tpu.vector_store %arg6[%c0_9, %c0_10], %11 {strides = array<i32>} : memref<8x128xf32, #tpu.memory_space<vmem>>, vector<8x128xf32>,
    return
  }
  func.func @transform_0(%arg0: i32) -> (i32, i32) {
    %c0_i32 = arith.constant 0 : i32
    %c0_i32_0 = arith.constant 0 : i32
    %c0_i32_1 = arith.constant 0 : i32
    return %c0_i32, %c0_i32_0 : i32, i32
  }
  func.func @transform_1(%arg0: i32) -> (i32, i32) {
    %c0_i32 = arith.constant 0 : i32
    %c0_i32_0 = arith.constant 0 : i32
    return %arg0, %c0_i32 : i32, i32
  }
  func.func @transform_2(%arg0: i32) -> (i32, i32) {
    %c0_i32 = arith.constant 0 : i32
    %c0_i32_0 = arith.constant 0 : i32
    return %arg0, %c0_i32 : i32, i32
  }
  func.func @transform_3(%arg0: i32) -> (i32, i32) {
    %c0_i32 = arith.constant 0 : i32
    %c0_i32_0 = arith.constant 0 : i32
    %c0_i32_1 = arith.constant 0 : i32
    return %c0_i32, %c0_i32_0 : i32, i32
  }
  func.func @transform_4(%arg0: i32) -> (i32, i32) {
    %c0_i32 = arith.constant 0 : i32
    %c0_i32_0 = arith.constant 0 : i32
    %c0_i32_1 = arith.constant 0 : i32
    return %c0_i32, %c0_i32_0 : i32, i32
  }
  func.func @transform_5(%arg0: i32) -> (i32, i32) {
    %c0_i32 = arith.constant 0 : i32
    %c0_i32_0 = arith.constant 0 : i32
    return %arg0, %c0_i32 : i32, i32
  }
}

</mosaic_0001>

<llo_original>
// kernel: tpu_custom_call.1
$region0: #{tpu_custom_call.1}
  #allocation0 [shape = 'u32[]', space=smem, size = 0x4, offset = 0x4, fixed_abs, tag = 'smem constant byte address 0x4 - core index']
  #allocation1 [shape = 'u32[72,128]{1,0:T(1,128)}', space=vmem, size = 0x9000, scoped, tag = 'internal scratch']
  #allocation2 [shape = 'f32[1,1]{1,0:T(1,128)S(6)}', space=smem, size = 0x200, scoped, tag = 'scoped memory for tpu_custom_call.1']
  %s0 = inlined_call_operand.<no memory space> [shape: f32[1,1], index: 0, kind: input, shape index: {}]
  %s1 = inlined_call_operand.hbm [shape: f32[4,128], index: 1, kind: input, shape index: {}]
  %s2 = inlined_call_operand.hbm [shape: f32[4,4], index: 2, kind: input, shape index: {}]
  %s3 = inlined_call_operand.hbm [shape: f32[4,128], index: 3, kind: input, shape index: {}]
  %s4 = inlined_call_operand.vmem [shape: f32[1,128], index: 4, kind: input, shape index: {}]
  %s5 = inlined_call_operand.hbm [shape: f32[4,128], index: 5, kind: output, shape index: {}]
  %s6 = sld [smem:[#allocation0]]
  $region42: #{tpu_custom_call.1} parent=0
    _
  %s8 = ssub.s32 1, %s6
  %s9 = scalar_select 0, %s8, %s6
  %10 = sst [smem:[#allocation2]] %s0
  $region1: #{tpu_custom_call.1} parent=0
    #allocation3 [shape = 'u8[4096]{0}', space=vmem, size = 0x1000, scoped, tag = 'input window, operand 1, single buffered']
    #allocation4 [shape = 's32[1]{0}', space=sflag, size = 0x4, scoped, tag = 'scoped memory for tpu_custom_call.1']
    #allocation5 [shape = 's32[1]{0}', space=sflag, size = 0x4, scoped, tag = 'scoped memory for tpu_custom_call.1']
    #allocation6 [shape = 'u8[4096]{0}', space=vmem, size = 0x1000, scoped, tag = 'input window, operand 2, single buffered']
    #allocation7 [shape = 's32[1]{0}', space=sflag, size = 0x4, scoped, tag = 'scoped memory for tpu_custom_call.1']
    #allocation8 [shape = 'u8[2048]{0}', space=vmem, size = 0x800, scoped, tag = 'input window, operand 3, single buffered']
    #allocation9 [shape = 'u8[4096]{0}', space=vmem, size = 0x1000, scoped, tag = 'output window, operand 0, single buffered']
    %11 = vsyncpa [#allocation4], 0
    %12 = vsyncpa [#allocation7], 0
    %13 = vsyncpa [#allocation5], 0
    // Predicated region
    $region2: #{tpu_custom_call.1} parent=1 // pred_check
      _
    $region3: #{tpu_custom_call.1} parent=1 // pred_check_branch
      %15 = sbr.rel (0) target = $region5
    $region4: #{tpu_custom_call.1} parent=1 // pred_region
      _
    $region5: #{tpu_custom_call.1} parent=1 // pred_fallthru
      _
    // Predicated region
    $region6: #{tpu_custom_call.1} parent=1 // pred_check
      _
    $region7: #{tpu_custom_call.1} parent=1 // pred_check_branch
      %17 = sbr.rel (0) target = $region9
    $region8: #{tpu_custom_call.1} parent=1 // pred_region
      %19 = vsyncadd [#allocation4], 64
      %s20 = sshll.u32 %s1, 4
      %s21 = int_to_ptr.hbm [resolvable:$true] %s20
      %s22 = sshll.u32 [#allocation3], 4
      %s23 = int_to_ptr.vmem [resolvable:$true] %s22
      %28 = dma.hbm_to_vmem [thread:$0]  %s21, 64, %s23, [#allocation4], 64, 64, 4
    $region9: #{tpu_custom_call.1} parent=1 // pred_fallthru
      _
    // Predicated region
    $region10: #{tpu_custom_call.1} parent=1 // pred_check
      _
    $region11: #{tpu_custom_call.1} parent=1 // pred_check_branch
      %30 = sbr.rel (0) target = $region13
    $region12: #{tpu_custom_call.1} parent=1 // pred_region
      %32 = vsyncadd [#allocation7], 64
      %s33 = sshll.u32 %s2, 4
      %s34 = int_to_ptr.hbm [resolvable:$true] %s33
      %s35 = sshll.u32 [#allocation6], 4
      %s36 = int_to_ptr.vmem [resolvable:$true] %s35
      %41 = dma.hbm_to_vmem [thread:$0]  %s34, 64, %s36, [#allocation7], 64, 64, 4
    $region13: #{tpu_custom_call.1} parent=1 // pred_fallthru
      _
    // Predicated region
    $region14: #{tpu_custom_call.1} parent=1 // pred_check
      _
    $region15: #{tpu_custom_call.1} parent=1 // pred_check_branch
      %43 = sbr.rel (0) target = $region17
    $region16: #{tpu_custom_call.1} parent=1 // pred_region
      %45 = vsyncadd [#allocation7], 0
      %s47 = sshll.u32 %s3, 4
      %s48 = int_to_ptr.hbm [resolvable:$true] %s47
      %s49 = sshll.u32 [#allocation8], 4
      %s50 = int_to_ptr.vmem [resolvable:$true] %s49
      %52 = dma.hbm_to_vmem [thread:$0]  %s48, 64, %s50, [#allocation7]
    $region17: #{tpu_custom_call.1} parent=1 // pred_fallthru
      _
    // Predicated region
    $region18: #{tpu_custom_call.1} parent=1 // pred_check
      _
    $region19: #{tpu_custom_call.1} parent=1 // pred_check_branch
      %54 = sbr.rel (0) target = $region21
    $region20: #{tpu_custom_call.1} parent=1 // pred_region
      _
    $region21: #{tpu_custom_call.1} parent=1 // pred_fallthru
      _
    // Predicated region
    $region22: #{tpu_custom_call.1} parent=1 // pred_check
      _
    $region23: #{tpu_custom_call.1} parent=1 // pred_check_branch
      %56 = sbr.rel (0) target = $region25
    $region24: #{tpu_custom_call.1} parent=1 // pred_region
      %58 = dma.done [#allocation4], 128
    $region25: #{tpu_custom_call.1} parent=1 // pred_fallthru
      _
    // Predicated region
    $region26: #{tpu_custom_call.1} parent=1 // pred_check
      _
    $region27: #{tpu_custom_call.1} parent=1 // pred_check_branch
      %60 = sbr.rel (0) target = $region29
    $region28: #{tpu_custom_call.1} parent=1 // pred_region
      %62 = dma.done [#allocation7], 128
    $region29: #{tpu_custom_call.1} parent=1 // pred_fallthru
      _
    // Predicated region
    $region30: #{tpu_custom_call.1} parent=1 // pred_check
      _
    $region31: #{tpu_custom_call.1} parent=1 // pred_check_branch
      %64 = sbr.rel (0) target = $region33
    $region32: #{tpu_custom_call.1} parent=1 // pred_region
      %66 = dma.done [#allocation7], 64
    $region33: #{tpu_custom_call.1} parent=1 // pred_fallthru
      _
    %s67 = sld [smem:[#allocation2]]
    %v68 = vld [vmem:[#allocation6] sm:$0xff]
    %v69 = vstv %s67
    %v70 = vsub.f32 %v69, %v68
    %v71 = vld [vmem:[#allocation8] sm:$0xf]
    %v72 = vld [vmem:[%s4] sm:$0x1]
    %v74 = vperm.slane %v72, 0
    %vm76 = vcmask 31744
    %v78 = vsel %vm76, %v70, 0
    %vm80 = vcmask 1043456
    %v82 = vsel %vm80, %v71, 0
    %84 = vmatpush.msra.mxu0 0.0
    %85 = vmatpush.msra.mxu0 0.0
    %86 = vmatpush.msra.mxu0 0.0
    %87 = vmatpush.msra.mxu0 0.0
    %88 = vmatpush.msra.mxu0 0.0
    %89 = vmatpush.msra.mxu0 0.0
    %90 = vmatpush.msra.mxu0 0.0
    %91 = vmatpush.msra.mxu0 0.0
    %92 = vmatpush.msra.mxu0 0.0
    %93 = vmatpush.msra.mxu0 0.0
    %94 = vmatpush.msra.mxu0 0.0
    %95 = vmatpush.msra.mxu0 0.0
    %96 = vmatpush.msra.mxu0 0.0
    %97 = vmatpush.msra.mxu0 0.0
    %98 = vmatpush.msra.mxu0 0.0
    %v99 = vand.u32 %v82, 4294901760
    %100 = vmatpush.msra.mxu0 %v99
    %v101 = vand.u32 %v78, 4294901760
    %v102 = vsub.f32 %v78, %v101
    %v103 = vand.u32 %v102, 4294901760
    %v104 = vsub.f32 %v102, %v103
    %v105 = vand.u32 %v104, 4294901760
    %106 = vmatmul.f32.gmra.mxu0 %v105
    %v107 = vpop.f32.mrf.mxu0
    %v108 = vadd.f32 %v74, %v107
    %109 = vdwg.mxu0
    %110 = vmatpush.msra.mxu0 0.0
    %111 = vmatpush.msra.mxu0 0.0
    %112 = vmatpush.msra.mxu0 0.0
    %113 = vmatpush.msra.mxu0 0.0
    %114 = vmatpush.msra.mxu0 0.0
    %115 = vmatpush.msra.mxu0 0.0
    %116 = vmatpush.msra.mxu0 0.0
    %117 = vmatpush.msra.mxu0 0.0
    %118 = vmatpush.msra.mxu0 0.0
    %119 = vmatpush.msra.mxu0 0.0
    %120 = vmatpush.msra.mxu0 0.0
    %121 = vmatpush.msra.mxu0 0.0
    %122 = vmatpush.msra.mxu0 0.0
    %123 = vmatpush.msra.mxu0 0.0
    %124 = vmatpush.msra.mxu0 0.0
    %v125 = vand.u32 %v82, 4294901760
    %v126 = vsub.f32 %v82, %v125
    %v127 = vand.u32 %v126, 4294901760
    %v128 = vsub.f32 %v126, %v127
    %v129 = vand.u32 %v128, 4294901760
    %130 = vmatpush.msra.mxu0 %v129
    %v131 = vand.u32 %v78, 4294901760
    %132 = vmatmul.f32.gmra.mxu0 %v131
    %v133 = vpop.f32.mrf.mxu0
    %v134 = vadd.f32 %v108, %v133
    %135 = vdwg.mxu0
    %136 = vmatpush.msra.mxu0 0.0
    %137 = vmatpush.msra.mxu0 0.0
    %138 = vmatpush.msra.mxu0 0.0
    %139 = vmatpush.msra.mxu0 0.0
    %140 = vmatpush.msra.mxu0 0.0
    %141 = vmatpush.msra.mxu0 0.0
    %142 = vmatpush.msra.mxu0 0.0
    %143 = vmatpush.msra.mxu0 0.0
    %144 = vmatpush.msra.mxu0 0.0
    %145 = vmatpush.msra.mxu0 0.0
    %146 = vmatpush.msra.mxu0 0.0
    %147 = vmatpush.msra.mxu0 0.0
    %148 = vmatpush.msra.mxu0 0.0
    %149 = vmatpush.msra.mxu0 0.0
    %150 = vmatpush.msra.mxu0 0.0
    %v151 = vand.u32 %v82, 4294901760
    %v152 = vsub.f32 %v82, %v151
    %153 = vmatpush.msra.mxu0 %v152
    %v154 = vand.u32 %v78, 4294901760
    %v155 = vsub.f32 %v78, %v154
    %156 = vmatmul.f32.gmra.mxu0 %v155
    %v157 = vpop.f32.mrf.mxu0
    %v158 = vadd.f32 %v134, %v157
    %159 = vdwg.mxu0
    %160 = vmatpush.msra.mxu0 0.0
    %161 = vmatpush.msra.mxu0 0.0
    %162 = vmatpush.msra.mxu0 0.0
    %163 = vmatpush.msra.mxu0 0.0
    %164 = vmatpush.msra.mxu0 0.0
    %165 = vmatpush.msra.mxu0 0.0
    %166 = vmatpush.msra.mxu0 0.0
    %167 = vmatpush.msra.mxu0 0.0
    %168 = vmatpush.msra.mxu0 0.0
    %169 = vmatpush.msra.mxu0 0.0
    %170 = vmatpush.msra.mxu0 0.0
    %171 = vmatpush.msra.mxu0 0.0
    %172 = vmatpush.msra.mxu0 0.0
    %173 = vmatpush.msra.mxu0 0.0
    %174 = vmatpush.msra.mxu0 0.0
    %v175 = vand.u32 %v82, 4294901760
    %176 = vmatpush.msra.mxu0 %v175
    %v177 = vand.u32 %v78, 4294901760
    %v178 = vsub.f32 %v78, %v177
    %v179 = vand.u32 %v178, 4294901760
    %180 = vmatmul.f32.gmra.mxu0 %v179
    %v181 = vpop.f32.mrf.mxu0
    %v182 = vadd.f32 %v158, %v181
    %183 = vdwg.mxu0
    %184 = vmatpush.msra.mxu0 0.0
    %185 = vmatpush.msra.mxu0 0.0
    %186 = vmatpush.msra.mxu0 0.0
    %187 = vmatpush.msra.mxu0 0.0
    %188 = vmatpush.msra.mxu0 0.0
    %189 = vmatpush.msra.mxu0 0.0
    %190 = vmatpush.msra.mxu0 0.0
    %191 = vmatpush.msra.mxu0 0.0
    %192 = vmatpush.msra.mxu0 0.0
    %193 = vmatpush.msra.mxu0 0.0
    %194 = vmatpush.msra.mxu0 0.0
    %195 = vmatpush.msra.mxu0 0.0
    %196 = vmatpush.msra.mxu0 0.0
    %197 = vmatpush.msra.mxu0 0.0
    %198 = vmatpush.msra.mxu0 0.0
    %v199 = vand.u32 %v82, 4294901760
    %v200 = vsub.f32 %v82, %v199
    %v201 = vand.u32 %v200, 4294901760
    %202 = vmatpush.msra.mxu0 %v201
    %v203 = vand.u32 %v78, 4294901760
    %204 = vmatmul.f32.gmra.mxu0 %v203
    %v205 = vpop.f32.mrf.mxu0
    %v206 = vadd.f32 %v182, %v205
    %207 = vdwg.mxu0
    %208 = vmatpush.msra.mxu0 0.0
    %209 = vmatpush.msra.mxu0 0.0
    %210 = vmatpush.msra.mxu0 0.0
    %211 = vmatpush.msra.mxu0 0.0
    %212 = vmatpush.msra.mxu0 0.0
    %213 = vmatpush.msra.mxu0 0.0
    %214 = vmatpush.msra.mxu0 0.0
    %215 = vmatpush.msra.mxu0 0.0
    %216 = vmatpush.msra.mxu0 0.0
    %217 = vmatpush.msra.mxu0 0.0
    %218 = vmatpush.msra.mxu0 0.0
    %219 = vmatpush.msra.mxu0 0.0
    %220 = vmatpush.msra.mxu0 0.0
    %221 = vmatpush.msra.mxu0 0.0
    %222 = vmatpush.msra.mxu0 0.0
    %v223 = vand.u32 %v82, 4294901760
    %224 = vmatpush.msra.mxu0 %v223
    %v225 = vand.u32 %v78, 4294901760
    %226 = vmatmul.f32.gmra.mxu0 %v225
    %v227 = vpop.f32.mrf.mxu0
    %v228 = vadd.f32 %v206, %v227
    %229 = vdwg.mxu0
    %v230 = vand.u32 2147483647, %v228
    %vm231 = vcmp.le.f32.partialorder %v230, 0.7853982
    %vm232 = vcmp.lt.s32.totalorder %v228, 0
    %v233 = vand.u32 %v228, 2139095040
    %v234 = vshrl.u32 %v233, 23
    %v235 = vsub.s32 %v234, 127
    %v236 = vand.u32 2147483647, %v228
    %v237 = vand.u32 %v236, 8388607
    %v238 = vor.u32 %v237, 8388608
    %v239 = vsub.s32 0, %v238
    %v240 = vadd.s32 %v235, 1
    %vm241 = vcmp.gt.s32.totalorder %v240, 0
    %v242 = vsel %vm241, %v240, 0
    %v243 = vshrl.u32 %v242, 5
    %v244 = vand.u32 %v242, 31
    %v245 = vsub.s32 32, %v244
    %v246 = vshrl.u32 683565275, %v245
    %v247 = vshll.u32 683565275, %v244
    %v248 = vshrl.u32 2475754826, %v245
    %v249 = vor.u32 %v247, %v248
    %v250 = vshll.u32 2475754826, %v244
    %v251 = vshrl.u32 2131351028, %v245
    %v252 = vor.u32 %v250, %v251
    %v253 = vshll.u32 2131351028, %v244
    %v254 = vshrl.u32 2102212464, %v245
    %v255 = vor.u32 %v253, %v254
    %v256 = vshll.u32 2102212464, %v244
    %v257 = vshrl.u32 920167782, %v245
    %v258 = vor.u32 %v256, %v257
    %v259 = vshll.u32 920167782, %v244
    %v260 = vshrl.u32 1326507024, %v245
    %v261 = vor.u32 %v259, %v260
    %vm262 = vcmp.lt.s32.totalorder %v243, 1
    %vm263 = vcmp.lt.s32.totalorder %v243, 2
    %vm264 = vcmp.lt.s32.totalorder %v243, 3
    %vm265 = vcmp.lt.s32.totalorder %v243, 4
    %v266 = vsel %vm262, %v246, %v249
    %v267 = vsel %vm265, %v255, 2102212464
    %v268 = vsel %vm264, %v252, %v267
    %v269 = vsel %vm263, %v266, %v268
    %v270 = vsel %vm262, %v249, %v252
    %v271 = vsel %vm265, %v258, 920167782
    %v272 = vsel %vm264, %v255, %v271
    %v273 = vsel %vm263, %v270, %v272
    %v274 = vsel %vm262, %v252, %v255
    %v275 = vsel %vm265, %v261, 1326507024
    %v276 = vsel %vm264, %v258, %v275
    %v277 = vsel %vm263, %v274, %v276
    %v278 = vshll.u32 %v238, 8
    %v279 = vand.u32 %v278, 65535
    %v280 = vshrl.u32 %v278, 16
    %v281 = vand.u32 %v277, 65535
    %v282 = vshrl.u32 %v277, 16
    %v283 = vmul.u32 %v279, %v281
    %v284 = vmul.u32 %v279, %v282
    %v285 = vmul.u32 %v280, %v281
    %v286 = vmul.u32 %v280, %v282
    %v287 = vshll.u32 %v284, 16
    %v288 = vshrl.u32 %v284, 16
    %v289 = vshll.u32 %v285, 16
    %v290 = vshrl.u32 %v285, 16
    %vm291 = vc.u32 %v283, %v287
    %v292 = vsel %vm291, 1, 0
    %v293 = vadd.s32 %v283, %v287
    %v294 = vadd.s32 %v286, %v292
    %vm295 = vc.u32 %v293, %v289
    %v296 = vsel %vm295, 1, 0
    %v297 = vadd.s32 %v293, %v289
    %v298 = vadd.s32 %v294, %v296
    %v299 = vadd.s32 %v298, %v288
    %v300 = vadd.s32 %v299, %v290
    %v301 = vand.u32 %v278, 65535
    %v302 = vshrl.u32 %v278, 16
    %v303 = vand.u32 %v273, 65535
    %v304 = vshrl.u32 %v273, 16
    %v305 = vmul.u32 %v301, %v303
    %v306 = vmul.u32 %v301, %v304
    %v307 = vmul.u32 %v302, %v303
    %v308 = vmul.u32 %v302, %v304
    %v309 = vshll.u32 %v306, 16
    %v310 = vshrl.u32 %v306, 16
    %v311 = vshll.u32 %v307, 16
    %v312 = vshrl.u32 %v307, 16
    %vm313 = vc.u32 %v305, %v309
    %v314 = vsel %vm313, 1, 0
    %v315 = vadd.s32 %v305, %v309
    %v316 = vadd.s32 %v308, %v314
    %vm317 = vc.u32 %v315, %v311
    %v318 = vsel %vm317, 1, 0
    %v319 = vadd.s32 %v315, %v311
    %v320 = vadd.s32 %v316, %v318
    %v321 = vadd.s32 %v320, %v310
    %v322 = vadd.s32 %v321, %v312
    %v323 = vmul.u32 %v278, %v269
    %v324 = vadd.s32 %v300, %v319
    %vm325 = vc.u32 %v300, %v319
    %v326 = vadd.s32 %v322, 1
    %v327 = vsel %vm325, %v326, %v322
    %v328 = vadd.s32 %v323, %v327
    %v329 = vadd.s32 %v328, 536870912
    %v330 = vshrl.u32 %v329, 30
    %v331 = vshll.u32 %v330, 30
    %v332 = vsub.s32 %v328, %v331
    %vm333 = vcmp.lt.s32.totalorder %v332, 0
    %v334 = vsub.s32 0, %v332
    %v335 = vsel %vm333, %v334, %v332
    %v336 = vclz %v335
    %v337 = vsub.s32 %v336, 2
    %vm338 = vcmp.gt.s32.totalorder 0, %v337
    %v339 = vsel %vm338, 0, %v337
    %v340 = vsub.s32 32, %v339
    %v341 = vshll.u32 %v332, %v339
    %v342 = vshrl.u32 %v324, %v340
    %v343 = vor.u32 %v341, %v342
    %v344 = vsub.s32 4294967266, %v339
    %v345 = vadd.s32 %v344, 127
    %v346 = vshll.u32 %v345, 23
    %v347 = vor.u32 4788187, %v346
    %v348 = vand.u32 2147483647, %v347
    %v350 = vcvt.s32.f32 %v343
    %v351 = vmul.f32 %v350, %v348
    %v352 = vxor.u32 %v351, 2147483648
    %v353 = vsel %vm232, %v352, %v351
    %v354 = vsub.s32 4, %v330
    %v355 = vsel %vm232, %v354, %v330
    %v356 = vsel %vm231, %v228, %v353
    %v357 = vsel %vm231, 0, %v355
    %v358 = vmul.f32 %v356, %v356
    %v359 = vmul.f32 %v358, -0.001358992
    %v360 = vadd.f32 %v359, 0.041655596
    %v361 = vmul.f32 %v358, %v360
    %v362 = vadd.f32 %v361, -0.4999988
    %v363 = vmul.f32 %v358, %v362
    %v364 = vadd.f32 1.0, %v363
    %v365 = vmul.f32 %v356, %v356
    %v366 = vmul.f32 %v365, -0.00019511016
    %v367 = vadd.f32 %v366, 0.008332121
    %v368 = vmul.f32 %v365, %v367
    %v369 = vadd.f32 %v368, -0.16666654
    %v370 = vmul.f32 %v365, %v369
    %v371 = vadd.f32 %v370, 1.0
    %v372 = vmul.f32 %v371, %v356
    %vm373 = vweird.f32 %v228
    %v374 = vadd.s32 %v357, 3
    %v375 = vand.u32 %v374, 3
    %vm376 = vcmp.lt.s32.totalorder %v375, 2
    %vm377 = vcmp.eq.s32.totalorder %v375, 0
    %v378 = vxor.u32 %v372, 2147483648
    %v379 = vsel %vm377, %v364, %v378
    %vm380 = vcmp.eq.s32.totalorder %v375, 2
    %v381 = vxor.u32 %v364, 2147483648
    %v382 = vsel %vm380, %v381, %v372
    %v383 = vsel %vm376, %v379, %v382
    %v384 = vsel %vm373, nan, %v383
    %v385 = vld [vmem:[#allocation3] sm:$0xff]
    %v386 = vadd.f32 %v385, %v384
    %387 = vst [vmem:[#allocation9] sm:$0xff] %v386
    // Predicated region
    $region34: #{tpu_custom_call.1} parent=1 // pred_check
      _
    $region35: #{tpu_custom_call.1} parent=1 // pred_check_branch
      %389 = sbr.rel (0) target = $region37
    $region36: #{tpu_custom_call.1} parent=1 // pred_region
      %391 = vsyncadd [#allocation5], 64
      %s392 = sshll.u32 [#allocation9], 4
      %s393 = int_to_ptr.vmem [resolvable:$true] %s392
      %s394 = sshll.u32 %s5, 4
      %s395 = int_to_ptr.hbm [resolvable:$true] %s394
      %400 = dma.vmem_to_hbm [thread:$0]  %s393, 64, %s395, [#allocation5], 64, 64, 4
    $region37: #{tpu_custom_call.1} parent=1 // pred_fallthru
      _
    // Predicated region
    $region38: #{tpu_custom_call.1} parent=1 // pred_check
      _
    $region39: #{tpu_custom_call.1} parent=1 // pred_check_branch
      %402 = sbr.rel (0) target = $region41
    $region40: #{tpu_custom_call.1} parent=1 // pred_region
      %404 = dma.done [#allocation5], 128
    $region41: #{tpu_custom_call.1} parent=1 // pred_fallthru
      _
    %405 = vsyncpa [#allocation4], 1
    %406 = vsyncpa [#allocation7], 1
    %407 = vsyncpa [#allocation5], 1

</llo_original>
